<compile_context>
chip_gen: v6e
topology: v6e:2x2x1
jax: 0.10.0
libtpu: 0.0.40
codegen_flags: <defaults>
</compile_context>

<pallas_src>
import functools

import jax
import jax.numpy as jnp
from jax.experimental import pallas as pl
from jax.experimental.pallas import tpu as pltpu


def _round_up(x, m):
    return ((x + m - 1) // m) * m


def _choose_tiling(batch, block_b):
    """Pick (tile_rows, num_steps) for the batch axis.

    Small batches run in a single grid step (grid iterations are serial
    overhead on v5e/v6e, ~0.35us each).  Larger batches use balanced tiles
    whose row count is a multiple of 128 so the lane-dense (1, tb) output
    blocks stay (8,128)-aligned; the batch axis is marked "parallel" so v7x
    megacore can shard the steps across both TensorCores.
    """
    if batch <= block_b:
        return _round_up(batch, 8), 1
    n_steps = pl.cdiv(batch, block_b)
    tb = _round_up(pl.cdiv(batch, n_steps), 128)   # balanced + lane-aligned
    n_steps = pl.cdiv(batch, tb)
    return tb, n_steps


def _qnet_kernel(s_ref, a_ref, w1_ref, b1_ref, w2_ref, b2_ref, w3_ref, b3_ref,
                 o_ref):
    """One batch tile: fused 3-layer MLP, everything VMEM/SMEM resident."""
    cdt = w1_ref.dtype                                      # bf16 (or f32)

    # Layer 1: in-kernel concat -> ONE K=(S+A) MXU pass (no wrapper concat,
    # no split-weight double M-sweep).  Cast to the MXU dtype in-kernel so
    # it hides under the matmul instead of being a separate HBM-touching op.
    x = jnp.concatenate([s_ref[...], a_ref[...]], axis=-1).astype(cdt)
    h1 = jnp.dot(x, w1_ref[...],
                 preferred_element_type=jnp.float32) + b1_ref[...]
    h1 = jnp.maximum(h1, 0.0)                               # f32 [TB, Hp]

    # Layer 2.
    h2 = jnp.dot(h1.astype(w2_ref.dtype), w2_ref[...],
                 preferred_element_type=jnp.float32) + b2_ref[...]
    h2 = jnp.maximum(h2, 0.0)                               # f32 [TB, Hp]

    # Layer 3 (out_features == 1): VPU multiply + lane reduction instead of a
    # degenerate N=1 MXU matmul.  w3_ref is the transposed row [1, Hp] (f32),
    # b3 is a scalar in SMEM.
    q = jnp.sum(h2 * w3_ref[...], axis=-1) + b3_ref[0]      # f32 [TB]

    # Lane-dense store: one (1, TB) row block (unmasked lane-wise stores,
    # contiguous writeback) instead of a (TB, 1) column of masked stores.
    o_ref[...] = q.reshape(1, q.shape[0])


@functools.partial(jax.jit, static_argnames=("block_b",))
def qnetwork_forward(state, action, kernel_params, *, block_b=1024):
    """Pallas-backed QNetwork.forward(state, action) -> [B, 1] float32.

    `kernel_params` must come from `prepare_qnetwork_params`.
    """
    w1, b1, w2, b2, w3row, b3 = kernel_params
    state = state.astype(jnp.float32)
    action = action.astype(jnp.float32)

    batch, sdim = state.shape
    adim = action.shape[1]
    hp = w2.shape[0]

    tb, n_steps = _choose_tiling(batch, block_b)
    bpad = tb * n_steps

    flops = 2 * batch * ((sdim + adim) * hp + hp * hp + hp)
    bytes_accessed = (
        (state.size + action.size + batch) * 4
        + sum(int(p.size) * p.dtype.itemsize for p in kernel_params))

    q_row = pl.pallas_call(
        _qnet_kernel,
        out_shape=jax.ShapeDtypeStruct((1, bpad), jnp.float32),
        grid=(n_steps,),
        in_specs=[
            pl.BlockSpec((tb, sdim), lambda i: (i, 0)),         # state tile
            pl.BlockSpec((tb, adim), lambda i: (i, 0)),         # action tile
            pl.BlockSpec((sdim + adim, hp), lambda i: (0, 0)),  # W1 (resident)
            pl.BlockSpec((1, hp), lambda i: (0, 0)),            # b1
            pl.BlockSpec((hp, hp), lambda i: (0, 0)),           # W2 (resident)
            pl.BlockSpec((1, hp), lambda i: (0, 0)),            # b2
            pl.BlockSpec((1, hp), lambda i: (0, 0)),            # W3 row
            pl.BlockSpec(memory_space=pltpu.MemorySpace.SMEM),  # b3 scalar
        ],
        out_specs=pl.BlockSpec((1, tb), lambda i: (0, i)),
        compiler_params=pltpu.CompilerParams(
            dimension_semantics=("parallel",),
            vmem_limit_bytes=32 * 1024 * 1024),
        cost_estimate=pl.CostEstimate(
            flops=flops, transcendentals=0, bytes_accessed=bytes_accessed),
    )(state, action, w1, b1, w2, b2, w3row, b3)

    # Columns past `batch` (padded grid tail) were computed from stale VMEM
    # rows of the partial input blocks; they are sliced off here (all ops are
    # row-independent, so valid rows are unaffected).
    return q_row[0, :batch].reshape(batch, 1)


def init_qnetwork_params(key, statedim, actiondim, hiddendim, init_w=3e-4):
    """Raw params matching the PyTorch module (weights stored [in, out])."""
    k1, k2, k3, k4, k5, k6 = jax.random.split(key, 6)
    in1 = statedim + actiondim
    lim1 = 1.0 / jnp.sqrt(in1)
    lim2 = 1.0 / jnp.sqrt(hiddendim)

    w1 = jax.random.uniform(k1, (in1, hiddendim), jnp.float32, -lim1, lim1)
    b1 = jax.random.uniform(k2, (1, hiddendim), jnp.float32, -lim1, lim1)
    w2 = jax.random.uniform(k3, (hiddendim, hiddendim), jnp.float32, -lim2, lim2)
    b2 = jax.random.uniform(k4, (1, hiddendim), jnp.float32, -lim2, lim2)
    w3 = jax.random.uniform(k5, (hiddendim, 1), jnp.float32, -init_w, init_w)
    b3 = jax.random.uniform(k6, (1, 1), jnp.float32, -init_w, init_w)
    return (w1, b1, w2, b2, w3, b3)


def prepare_qnetwork_params(params, compute_dtype=jnp.bfloat16,
                            lane_multiple=128):
    """One-time param prep for the kernel.

    * Zero-pads the hidden dim to a multiple of `lane_multiple` (exact:
      padded units stay 0 through ReLU and contribute 0 to q).  Use 256 on
      v6e/v7x (2x256^2 MXU), 128 on v5e.
    * Stores the matmul weights (W1, W2) in `compute_dtype` (bf16 -> MXU
      native, f32 accumulation); pass float32 to keep a full-precision path.
    * Biases and the W3 row stay f32 (VPU side); W3 is a [1, Hp] row for the
      VPU multiply + lane-reduce head; b3 becomes a (1,) scalar for SMEM.
    """
    w1, b1, w2, b2, w3, b3 = params
    h = w1.shape[1]
    hp = _round_up(h, lane_multiple)
    pad = hp - h

    w1p = jnp.pad(w1, ((0, 0), (0, pad))).astype(compute_dtype)
    b1p = jnp.pad(b1.reshape(1, h), ((0, 0), (0, pad))).astype(jnp.float32)
    w2p = jnp.pad(w2, ((0, pad), (0, pad))).astype(compute_dtype)
    b2p = jnp.pad(b2.reshape(1, h), ((0, 0), (0, pad))).astype(jnp.float32)
    w3row = jnp.pad(w3.reshape(1, h), ((0, 0), (0, pad))).astype(jnp.float32)
    b3p = b3.reshape(1).astype(jnp.float32)
    return (w1p, b1p, w2p, b2p, w3row, b3p)


def qnetwork_reference(state, action, params):
    """Pure-JAX f32 reference of the PyTorch forward."""
    w1, b1, w2, b2, w3, b3 = params
    x = jnp.concatenate([state, action], axis=-1)
    h1 = jax.nn.relu(x @ w1 + b1)
    h2 = jax.nn.relu(h1 @ w2 + b2)
    return h2 @ w3 + b3


if __name__ == "__main__":
    batch, statedim, actiondim, hiddendim = 8, 12, 4, 32

    key = jax.random.PRNGKey(0)
    k_state, k_action, k_params, k_big = jax.random.split(key, 4)

    state = jax.random.normal(k_state, (batch, statedim), jnp.float32)
    action = jax.random.normal(k_action, (batch, actiondim), jnp.float32)

    raw_params = init_qnetwork_params(k_params, statedim, actiondim, hiddendim)
    kernel_params = prepare_qnetwork_params(raw_params)

    # Small-batch check (single grid step, whole batch in one tile).
    q = qnetwork_forward(state, action, kernel_params)
    jax.block_until_ready(q)
    q_ref = qnetwork_reference(state, action, raw_params)
    assert q.shape == (batch, 1), q.shape
    # bf16 MXU inputs -> small drift vs the f32 reference.
    assert jnp.allclose(q, q_ref, atol=1e-3, rtol=5e-2), "mismatch vs reference"

    # Larger, non-divisible batch: exercises the multi-step "parallel" grid,
    # balanced 128-row tiles, and the padded lane-dense output tail.
    big_b = 300
    kb1, kb2 = jax.random.split(k_big)
    state_b = jax.random.normal(kb1, (big_b, statedim), jnp.float32)
    action_b = jax.random.normal(kb2, (big_b, actiondim), jnp.float32)
    q_b = qnetwork_forward(state_b, action_b, kernel_params, block_b=128)
    jax.block_until_ready(q_b)
    q_b_ref = qnetwork_reference(state_b, action_b, raw_params)
    assert q_b.shape == (big_b, 1), q_b.shape
    assert jnp.allclose(q_b, q_b_ref, atol=1e-3, rtol=5e-2), "mismatch (grid)"

    print("KERNEL_OK")
</pallas_src>

<mosaic_0001>
module attributes {stable_mosaic.version = 11 : i64} {
  func.func @_qnet_kernel(%arg0: i32, %arg1: memref<8x12xf32, #tpu.memory_space<vmem>>, %arg2: memref<8x4xf32, #tpu.memory_space<vmem>>, %arg3: memref<16x128xbf16, #tpu.memory_space<vmem>>, %arg4: memref<1x128xf32, #tpu.memory_space<vmem>>, %arg5: memref<128x128xbf16, #tpu.memory_space<vmem>>, %arg6: memref<1x128xf32, #tpu.memory_space<vmem>>, %arg7: memref<1x128xf32, #tpu.memory_space<vmem>>, %arg8: memref<1xf32, #tpu.memory_space<smem>>, %arg9: memref<1x8xf32, #tpu.memory_space<vmem>>) attributes {dimension_semantics = [#tpu.dimension_semantics<parallel>], iteration_bounds = array<i64: 1>, scalar_prefetch = 0 : i64, scratch_operands = 0 : i64, tpu.core_type = #tpu.core_type<tc>, window_params = [{transform_indices = @transform_0, window_bounds = array<i64: 8, 12>}, {transform_indices = @transform_1, window_bounds = array<i64: 8, 4>}, {pipeline_mode = #tpu.pipeline_mode<synchronous>, transform_indices = @transform_2, window_bounds = array<i64: 16, 128>}, {pipeline_mode = #tpu.pipeline_mode<synchronous>, transform_indices = @transform_3, window_bounds = array<i64: 1, 128>}, {pipeline_mode = #tpu.pipeline_mode<synchronous>, transform_indices = @transform_4, window_bounds = array<i64: 128, 128>}, {pipeline_mode = #tpu.pipeline_mode<synchronous>, transform_indices = @transform_5, window_bounds = array<i64: 1, 128>}, {pipeline_mode = #tpu.pipeline_mode<synchronous>, transform_indices = @transform_6, window_bounds = array<i64: 1, 128>}, {transform_indices = @transform_7, window_bounds = array<i64: 1>}, {transform_indices = @transform_8, window_bounds = array<i64: 1, 8>}]} {
    %c0 = arith.constant 0 : index
    %c0_0 = arith.constant 0 : index
    %0 = vector.load %arg1[%c0, %c0_0] : memref<8x12xf32, #tpu.memory_space<vmem>>, vector<8x12xf32>
    %c0_1 = arith.constant 0 : index
    %c0_2 = arith.constant 0 : index
    %1 = vector.load %arg2[%c0_1, %c0_2] : memref<8x4xf32, #tpu.memory_space<vmem>>, vector<8x4xf32>
    %2 = tpu.concatenate %0, %1 in 1 : vector<8x12xf32>, vector<8x4xf32> -> vector<8x16xf32>
    %3 = arith.truncf %2 : vector<8x16xf32> to vector<8x16xbf16>
    %c0_3 = arith.constant 0 : index
    %c0_4 = arith.constant 0 : index
    %4 = vector.load %arg3[%c0_3, %c0_4] : memref<16x128xbf16, #tpu.memory_space<vmem>>, vector<16x128xbf16>
    %cst = arith.constant dense<0.000000e+00> : vector<8x128xf32>
    %5 = tpu.matmul %3, %4, %cst {dimension_numbers = #tpu.dot_dimension_numbers<[1], [0], [0], [1], [0, 0, 1, 1], [], []>} : vector<8x16xbf16>, vector<16x128xbf16>, vector<8x128xf32> -> vector<8x128xf32>
    %c0_5 = arith.constant 0 : index
    %c0_6 = arith.constant 0 : index
    %6 = vector.load %arg4[%c0_5, %c0_6] : memref<1x128xf32, #tpu.memory_space<vmem>>, vector<1x128xf32>
    %7 = vector.broadcast %6 : vector<1x128xf32> to vector<8x128xf32>
    %8 = arith.addf %5, %7 : vector<8x128xf32>
    %cst_7 = arith.constant 0.000000e+00 : f32
    %9 = vector.broadcast %cst_7 : f32 to vector<8x128xf32>
    %10 = arith.maximumf %8, %9 : vector<8x128xf32>
    %11 = arith.truncf %10 : vector<8x128xf32> to vector<8x128xbf16>
    %c0_8 = arith.constant 0 : index
    %c0_9 = arith.constant 0 : index
    %12 = vector.load %arg5[%c0_8, %c0_9] : memref<128x128xbf16, #tpu.memory_space<vmem>>, vector<128x128xbf16>
    %cst_10 = arith.constant dense<0.000000e+00> : vector<8x128xf32>
    %13 = tpu.matmul %11, %12, %cst_10 {dimension_numbers = #tpu.dot_dimension_numbers<[1], [0], [0], [1], [0, 0, 1, 1], [], []>} : vector<8x128xbf16>, vector<128x128xbf16>, vector<8x128xf32> -> vector<8x128xf32>
    %c0_11 = arith.constant 0 : index
    %c0_12 = arith.constant 0 : index
    %14 = vector.load %arg6[%c0_11, %c0_12] : memref<1x128xf32, #tpu.memory_space<vmem>>, vector<1x128xf32>
    %15 = vector.broadcast %14 : vector<1x128xf32> to vector<8x128xf32>
    %16 = arith.addf %13, %15 : vector<8x128xf32>
    %cst_13 = arith.constant 0.000000e+00 : f32
    %17 = vector.broadcast %cst_13 : f32 to vector<8x128xf32>
    %18 = arith.maximumf %16, %17 : vector<8x128xf32>
    %c0_14 = arith.constant 0 : index
    %c0_15 = arith.constant 0 : index
    %19 = vector.load %arg7[%c0_14, %c0_15] : memref<1x128xf32, #tpu.memory_space<vmem>>, vector<1x128xf32>
    %20 = vector.broadcast %19 : vector<1x128xf32> to vector<8x128xf32>
    %21 = arith.mulf %18, %20 : vector<8x128xf32>
    %cst_16 = arith.constant dense<0.000000e+00> : vector<8xf32>
    %22 = vector.multi_reduction <add>, %21, %cst_16 [1] : vector<8x128xf32> to vector<8xf32>
    %c0_17 = arith.constant 0 : index
    %23 = memref.load %arg8[%c0_17] : memref<1xf32, #tpu.memory_space<smem>>
    %24 = vector.broadcast %23 : f32 to vector<8xf32>
    %25 = arith.addf %22, %24 : vector<8xf32>
    %26 = vector.shape_cast %25 : vector<8xf32> to vector<1x8xf32>
    %c0_18 = arith.constant 0 : index
    %c0_19 = arith.constant 0 : index
    %27 = vector.load %arg9[%c0_18, %c0_19] : memref<1x8xf32, #tpu.memory_space<vmem>>, vector<1x8xf32>
    tpu.vector_store %arg9[%c0_18, %c0_19], %26 {strides = array<i32>} : memref<1x8xf32, #tpu.memory_space<vmem>>, vector<1x8xf32>,
    return
  }
  func.func @transform_0(%arg0: i32) -> (i32, i32) {
    %c0_i32 = arith.constant 0 : i32
    %c0_i32_0 = arith.constant 0 : i32
    return %arg0, %c0_i32 : i32, i32
  }
  func.func @transform_1(%arg0: i32) -> (i32, i32) {
    %c0_i32 = arith.constant 0 : i32
    %c0_i32_0 = arith.constant 0 : i32
    return %arg0, %c0_i32 : i32, i32
  }
  func.func @transform_2(%arg0: i32) -> (i32, i32) {
    %c0_i32 = arith.constant 0 : i32
    %c0_i32_0 = arith.constant 0 : i32
    %c0_i32_1 = arith.constant 0 : i32
    return %c0_i32, %c0_i32_0 : i32, i32
  }
  func.func @transform_3(%arg0: i32) -> (i32, i32) {
    %c0_i32 = arith.constant 0 : i32
    %c0_i32_0 = arith.constant 0 : i32
    %c0_i32_1 = arith.constant 0 : i32
    return %c0_i32, %c0_i32_0 : i32, i32
  }
  func.func @transform_4(%arg0: i32) -> (i32, i32) {
    %c0_i32 = arith.constant 0 : i32
    %c0_i32_0 = arith.constant 0 : i32
    %c0_i32_1 = arith.constant 0 : i32
    return %c0_i32, %c0_i32_0 : i32, i32
  }
  func.func @transform_5(%arg0: i32) -> (i32, i32) {
    %c0_i32 = arith.constant 0 : i32
    %c0_i32_0 = arith.constant 0 : i32
    %c0_i32_1 = arith.constant 0 : i32
    return %c0_i32, %c0_i32_0 : i32, i32
  }
  func.func @transform_6(%arg0: i32) -> (i32, i32) {
    %c0_i32 = arith.constant 0 : i32
    %c0_i32_0 = arith.constant 0 : i32
    %c0_i32_1 = arith.constant 0 : i32
    return %c0_i32, %c0_i32_0 : i32, i32
  }
  func.func @transform_7(%arg0: i32) -> i32 {
    %c0_i32 = arith.constant 0 : i32
    %c0_i32_0 = arith.constant 0 : i32
    return %c0_i32 : i32
  }
  func.func @transform_8(%arg0: i32) -> (i32, i32) {
    %c0_i32 = arith.constant 0 : i32
    %c0_i32_0 = arith.constant 0 : i32
    return %c0_i32, %arg0 : i32, i32
  }
}

</mosaic_0001>

<llo_original>
// kernel: qnetwork_forward.1
$region0: #{qnetwork_forward.1}
  #allocation0 [shape = 'u32[]', space=smem, size = 0x4, offset = 0x4, fixed_abs, tag = 'smem constant byte address 0x4 - core index']
  #allocation1 [shape = 'u32[144,128]{1,0:T(1,128)}', space=vmem, size = 0x12000, scoped, tag = 'internal scratch']
  #allocation2 [shape = 'f32[1]{0:T(128)S(6)}', space=smem, size = 0x200, scoped, tag = 'scoped memory for qnetwork_forward.1']
  %s0 = inlined_call_operand.vmem [shape: f32[8,12], index: 0, kind: input, shape index: {}]
  %s1 = inlined_call_operand.vmem [shape: f32[8,4], index: 1, kind: input, shape index: {}]
  %s2 = inlined_call_operand.vmem [shape: bf16[16,128], index: 2, kind: input, shape index: {}]
  %s3 = inlined_call_operand.vmem [shape: f32[1,128], index: 3, kind: input, shape index: {}]
  %s4 = inlined_call_operand.hbm [shape: bf16[128,128], index: 4, kind: input, shape index: {}]
  %s5 = inlined_call_operand.vmem [shape: f32[1,128], index: 5, kind: input, shape index: {}]
  %s6 = inlined_call_operand.vmem [shape: f32[1,128], index: 6, kind: input, shape index: {}]
  %s7 = inlined_call_operand.<no memory space> [shape: f32[1], index: 7, kind: input, shape index: {}]
  %s8 = inlined_call_operand.hbm [shape: f32[1,8], index: 8, kind: output, shape index: {}]
  %s9 = sld [smem:[#allocation0]]
  $region46: #{qnetwork_forward.1} parent=0
    _
  %s11 = ssub.s32 1, %s9
  %s12 = scalar_select 0, %s11, %s9
  %13 = sst [smem:[#allocation2]] %s7
  $region1: #{qnetwork_forward.1} parent=0
    #allocation3 [shape = 'u8[32768]{0}', space=vmem, size = 0x8000, scoped, tag = 'input window, operand 4, single buffered']
    #allocation4 [shape = 's32[1]{0}', space=sflag, size = 0x4, scoped, tag = 'scoped memory for qnetwork_forward.1']
    #allocation5 [shape = 's32[1]{0}', space=sflag, size = 0x4, scoped, tag = 'scoped memory for qnetwork_forward.1']
    #allocation6 [shape = 'u8[512]{0}', space=vmem, size = 0x400, scoped, tag = 'output window, operand 0, single buffered']
    %14 = vsyncpa [#allocation4], 0
    %15 = vsyncpa [#allocation5], 0
    // Predicated region
    $region2: #{qnetwork_forward.1} parent=1 // pred_check
      _
    $region3: #{qnetwork_forward.1} parent=1 // pred_check_branch
      %17 = sbr.rel (0) target = $region5
    $region4: #{qnetwork_forward.1} parent=1 // pred_region
      _
    $region5: #{qnetwork_forward.1} parent=1 // pred_fallthru
      _
    // Predicated region
    $region6: #{qnetwork_forward.1} parent=1 // pred_check
      _
    $region7: #{qnetwork_forward.1} parent=1 // pred_check_branch
      %19 = sbr.rel (0) target = $region9
    $region8: #{qnetwork_forward.1} parent=1 // pred_region
      _
    $region9: #{qnetwork_forward.1} parent=1 // pred_fallthru
      _
    // Predicated region
    $region10: #{qnetwork_forward.1} parent=1 // pred_check
      _
    $region11: #{qnetwork_forward.1} parent=1 // pred_check_branch
      %21 = sbr.rel (0) target = $region13
    $region12: #{qnetwork_forward.1} parent=1 // pred_region
      _
    $region13: #{qnetwork_forward.1} parent=1 // pred_fallthru
      _
    // Predicated region
    $region14: #{qnetwork_forward.1} parent=1 // pred_check
      _
    $region15: #{qnetwork_forward.1} parent=1 // pred_check_branch
      %23 = sbr.rel (0) target = $region17
    $region16: #{qnetwork_forward.1} parent=1 // pred_region
      _
    $region17: #{qnetwork_forward.1} parent=1 // pred_fallthru
      _
    // Predicated region
    $region18: #{qnetwork_forward.1} parent=1 // pred_check
      _
    $region19: #{qnetwork_forward.1} parent=1 // pred_check_branch
      %25 = sbr.rel (0) target = $region21
    $region20: #{qnetwork_forward.1} parent=1 // pred_region
      %s27 = ssub.s32 1024, 1024
      %28 = vsyncadd [#allocation4], %s27
      %s29 = sshll.u32 [#allocation3], 4
      %s30 = int_to_ptr.vmem [resolvable:$true] %s29
      %35 = dma.hbm_to_vmem [thread:$0]  %s4, 1024, %s30, [#allocation4], 64, 64, 4
    $region21: #{qnetwork_forward.1} parent=1 // pred_fallthru
      _
    // Predicated region
    $region22: #{qnetwork_forward.1} parent=1 // pred_check
      _
    $region23: #{qnetwork_forward.1} parent=1 // pred_check_branch
      %37 = sbr.rel (0) target = $region25
    $region24: #{qnetwork_forward.1} parent=1 // pred_region
      _
    $region25: #{qnetwork_forward.1} parent=1 // pred_fallthru
      _
    // Predicated region
    $region26: #{qnetwork_forward.1} parent=1 // pred_check
      _
    $region27: #{qnetwork_forward.1} parent=1 // pred_check_branch
      %39 = sbr.rel (0) target = $region29
    $region28: #{qnetwork_forward.1} parent=1 // pred_region
      _
    $region29: #{qnetwork_forward.1} parent=1 // pred_fallthru
      _
    // Predicated region
    $region30: #{qnetwork_forward.1} parent=1 // pred_check
      _
    $region31: #{qnetwork_forward.1} parent=1 // pred_check_branch
      %41 = sbr.rel (0) target = $region33
    $region32: #{qnetwork_forward.1} parent=1 // pred_region
      _
    $region33: #{qnetwork_forward.1} parent=1 // pred_fallthru
      _
    // Predicated region
    $region34: #{qnetwork_forward.1} parent=1 // pred_check
      _
    $region35: #{qnetwork_forward.1} parent=1 // pred_check_branch
      %43 = sbr.rel (0) target = $region37
    $region36: #{qnetwork_forward.1} parent=1 // pred_region
      %44 = dma.done [#allocation4], 1024
    $region37: #{qnetwork_forward.1} parent=1 // pred_fallthru
      _
    %v46 = vld [vmem:[%s0] sm:$0xff]
    %v47 = vld [vmem:[%s1] sm:$0xff]
    %49 = vrot.lane.b32.xlu0 %v47, 12
    %v50 = vpop.permute.xlu0 %49
    %vm52 = vcmask 97280
    %v53 = vsel %vm52, %v46, %v50
    %v54 = vpack.c.bf16 %v53, %v53
    %v55 = vld [vmem:[%s2] sm:$0xf]
    %v56 = vld [vmem:[%s2 + $0x4] sm:$0xf]
    %v57 = vld [vmem:[%s3] sm:$0x1]
    %v59 = vlaneseq
    %v60 = vshrl.u32 %v59, 7
    %v61 = vsub.s32 0, %v60
    %v62 = vrot.slane %v57, %v61
    %v66 = vunpack.c.l.b16 %v55
    %v67 = vunpack.c.l.b16 %v56
    %v68 = vpack.c.b16 %v67, %v66
    %vm70 = vcmask 130048
    %v72 = vsel %vm70, %v54, 0
    %74 = vmatprep.subr.bf16.mxu0 0
    %75 = vmatpush1.bf16.msra.mxu0 0
    %76 = vmatprep.subr.bf16.mxu0 0
    %77 = vmatpush1.bf16.msra.mxu0 0
    %78 = vmatprep.subr.bf16.mxu0 0
    %79 = vmatpush1.bf16.msra.mxu0 0
    %80 = vmatprep.subr.bf16.mxu0 0
    %81 = vmatpush1.bf16.msra.mxu0 0
    %82 = vmatprep.subr.bf16.mxu0 0
    %83 = vmatpush1.bf16.msra.mxu0 0
    %84 = vmatprep.subr.bf16.mxu0 0
    %85 = vmatpush1.bf16.msra.mxu0 0
    %86 = vmatprep.subr.bf16.mxu0 0
    %87 = vmatpush1.bf16.msra.mxu0 0
    %88 = vmatprep.subr.bf16.mxu0 0
    %89 = vmatpush1.bf16.msra.mxu0 %v68
    %90 = vmatprep.subr.bf16.mxu0 0
    %91 = vmatpush2.bf16.msra.mxu0 0
    %92 = vmatprep.subr.bf16.mxu0 0
    %93 = vmatpush2.bf16.msra.mxu0 0
    %94 = vmatprep.subr.bf16.mxu0 0
    %95 = vmatpush2.bf16.msra.mxu0 0
    %96 = vmatprep.subr.bf16.mxu0 0
    %97 = vmatpush2.bf16.msra.mxu0 0
    %98 = vmatprep.subr.bf16.mxu0 0
    %99 = vmatpush2.bf16.msra.mxu0 0
    %100 = vmatprep.subr.bf16.mxu0 0
    %101 = vmatpush2.bf16.msra.mxu0 0
    %102 = vmatprep.subr.bf16.mxu0 0
    %103 = vmatpush2.bf16.msra.mxu0 0
    %104 = vmatprep.subr.bf16.mxu0 0
    %105 = vmatpush2.bf16.msra.mxu0 0
    %106 = vmatprep.mubr.bf16.mxu0 0
    %107 = vmatmul.mubr.bf16.gmra.mxu0 %v72
    %v108 = vpop.f32.mrf.mxu0
    %v109 = vadd.f32 %v62, %v108
    %v110 = vpop.f32.mrf.mxu0
    %v111 = vpop.f32.mrf.mxu0
    %v112 = vpop.f32.mrf.mxu0
    %113 = vdwg.mxu0
    %v114 = vmax.f32 %v109, 0.0
    %v115 = vpack.c.bf16 %v114, %v114
    %v116 = vld [vmem:[#allocation3] sm:$0xf]
    %v117 = vld [vmem:[#allocation3 + $0x4] sm:$0xf]
    %v118 = vld [vmem:[#allocation3 + $0x8] sm:$0xf]
    %v119 = vld [vmem:[#allocation3 + $0xc] sm:$0xf]
    %v120 = vld [vmem:[#allocation3 + $0x10] sm:$0xf]
    %v121 = vld [vmem:[#allocation3 + $0x14] sm:$0xf]
    %v122 = vld [vmem:[#allocation3 + $0x18] sm:$0xf]
    %v123 = vld [vmem:[#allocation3 + $0x1c] sm:$0xf]
    %v124 = vld [vmem:[#allocation3 + $0x20] sm:$0xf]
    %v125 = vld [vmem:[#allocation3 + $0x24] sm:$0xf]
    %v126 = vld [vmem:[#allocation3 + $0x28] sm:$0xf]
    %v127 = vld [vmem:[#allocation3 + $0x2c] sm:$0xf]
    %v128 = vld [vmem:[#allocation3 + $0x30] sm:$0xf]
    %v129 = vld [vmem:[#allocation3 + $0x34] sm:$0xf]
    %v130 = vld [vmem:[#allocation3 + $0x38] sm:$0xf]
    %v131 = vld [vmem:[#allocation3 + $0x3c] sm:$0xf]
    %v132 = vld [vmem:[%s5] sm:$0x1]
    %v134 = vlaneseq
    %v135 = vshrl.u32 %v134, 7
    %v136 = vsub.s32 0, %v135
    %v137 = vrot.slane %v132, %v136
    %v155 = vunpack.c.l.b16 %v116
    %v156 = vunpack.c.l.b16 %v117
    %v157 = vunpack.c.l.b16 %v118
    %v158 = vunpack.c.l.b16 %v119
    %v159 = vunpack.c.l.b16 %v120
    %v160 = vunpack.c.l.b16 %v121
    %v161 = vunpack.c.l.b16 %v122
    %v162 = vunpack.c.l.b16 %v123
    %v163 = vunpack.c.l.b16 %v124
    %v164 = vunpack.c.l.b16 %v125
    %v165 = vunpack.c.l.b16 %v126
    %v166 = vunpack.c.l.b16 %v127
    %v167 = vunpack.c.l.b16 %v128
    %v168 = vunpack.c.l.b16 %v129
    %v169 = vunpack.c.l.b16 %v130
    %v170 = vunpack.c.l.b16 %v131
    %v171 = vpack.c.b16 %v156, %v155
    %v172 = vpack.c.b16 %v158, %v157
    %v173 = vpack.c.b16 %v160, %v159
    %v174 = vpack.c.b16 %v162, %v161
    %v175 = vpack.c.b16 %v164, %v163
    %v176 = vpack.c.b16 %v166, %v165
    %v177 = vpack.c.b16 %v168, %v167
    %v178 = vpack.c.b16 %v170, %v169
    %187 = vmatprep.subr.bf16.mxu0 0
    %188 = vmatpush1.bf16.msra.mxu0 %v178
    %189 = vmatprep.subr.bf16.mxu0 0
    %190 = vmatpush1.bf16.msra.mxu0 %v177
    %191 = vmatprep.subr.bf16.mxu0 0
    %192 = vmatpush1.bf16.msra.mxu0 %v176
    %193 = vmatprep.subr.bf16.mxu0 0
    %194 = vmatpush1.bf16.msra.mxu0 %v175
    %195 = vmatprep.subr.bf16.mxu0 0
    %196 = vmatpush1.bf16.msra.mxu0 %v174
    %197 = vmatprep.subr.bf16.mxu0 0
    %198 = vmatpush1.bf16.msra.mxu0 %v173
    %199 = vmatprep.subr.bf16.mxu0 0
    %200 = vmatpush1.bf16.msra.mxu0 %v172
    %201 = vmatprep.subr.bf16.mxu0 0
    %202 = vmatpush1.bf16.msra.mxu0 %v171
    %203 = vmatprep.subr.bf16.mxu0 0
    %204 = vmatpush2.bf16.msra.mxu0 0
    %205 = vmatprep.subr.bf16.mxu0 0
    %206 = vmatpush2.bf16.msra.mxu0 0
    %207 = vmatprep.subr.bf16.mxu0 0
    %208 = vmatpush2.bf16.msra.mxu0 0
    %209 = vmatprep.subr.bf16.mxu0 0
    %210 = vmatpush2.bf16.msra.mxu0 0
    %211 = vmatprep.subr.bf16.mxu0 0
    %212 = vmatpush2.bf16.msra.mxu0 0
    %213 = vmatprep.subr.bf16.mxu0 0
    %214 = vmatpush2.bf16.msra.mxu0 0
    %215 = vmatprep.subr.bf16.mxu0 0
    %216 = vmatpush2.bf16.msra.mxu0 0
    %217 = vmatprep.subr.bf16.mxu0 0
    %218 = vmatpush2.bf16.msra.mxu0 0
    %219 = vmatprep.mubr.bf16.mxu0 0
    %220 = vmatmul.mubr.bf16.gmra.mxu0 %v115
    %v221 = vpop.f32.mrf.mxu0
    %v222 = vadd.f32 %v137, %v221
    %v223 = vpop.f32.mrf.mxu0
    %v224 = vpop.f32.mrf.mxu0
    %v225 = vpop.f32.mrf.mxu0
    %226 = vdwg.mxu0
    %v227 = vmax.f32 %v222, 0.0
    %v228 = vld [vmem:[%s6] sm:$0x1]
    %v230 = vlaneseq
    %v231 = vshrl.u32 %v230, 7
    %v232 = vsub.s32 0, %v231
    %v233 = vrot.slane %v228, %v232
    %v235 = vmul.f32 %v227, %v233
    %236 = vadd.xlane.f32.xlu0 %v235
    %v237 = vpop.xlane.xlu0 %236
    %s238 = sld [smem:[#allocation2]]
    %v239 = vstv %s238
    %v240 = vadd.f32 %v237, %v239
    %v242 = vlaneseq
    %v243 = vand.u32 %v242, 127
    %v244 = vlaneseq
    %v245 = vshrl.u32 %v244, 7
    %v246 = vsub.s32 %v243, %v245
    %v247 = vrot.slane %v240, %v246
    %vm249 = vcmask 57344
    %250 = vst.msk [vmem:[#allocation6] sm:$0x1] %vm249, %v247
    // Predicated region
    $region38: #{qnetwork_forward.1} parent=1 // pred_check
      _
    $region39: #{qnetwork_forward.1} parent=1 // pred_check_branch
      %252 = sbr.rel (0) target = $region41
    $region40: #{qnetwork_forward.1} parent=1 // pred_region
      %s254 = ssub.s32 16, 16
      %255 = vsyncadd [#allocation5], %s254
      %s257 = sshll.u32 [#allocation6], 4
      %s258 = int_to_ptr.vmem [resolvable:$true] %s257
      %260 = dma.vmem_to_hbm [thread:$0]  %s258, 16, %s8, [#allocation5]
    $region41: #{qnetwork_forward.1} parent=1 // pred_fallthru
      _
    // Predicated region
    $region42: #{qnetwork_forward.1} parent=1 // pred_check
      _
    $region43: #{qnetwork_forward.1} parent=1 // pred_check_branch
      %262 = sbr.rel (0) target = $region45
    $region44: #{qnetwork_forward.1} parent=1 // pred_region
      %263 = dma.done [#allocation5], 16
    $region45: #{qnetwork_forward.1} parent=1 // pred_fallthru
      _
    %264 = vsyncpa [#allocation4], 1
    %265 = vsyncpa [#allocation5], 1

</llo_original>
